<compile_context>
chip_gen: v7x
topology: tpu7x:2x2x1
jax: 0.10.0
libtpu: 0.0.40
codegen_flags: <defaults>
</compile_context>

<pallas_src>
import functools

import jax
import jax.numpy as jnp
from jax.experimental import pallas as pl
from jax.experimental.pallas import tpu as pltpu


def _sepconv_kernel(x_hbm, wdw_ref, wpw_ref, bfused_ref, o_ref, xpad_ref, dma_sem,
                    *, K, P, T, T_tile, C_in):
    """One (batch, time-tile) grid step.

    x_hbm     : (B, T, C_in)       full input, left in HBM (memory_space=pl.ANY)
    wdw_ref   : (K, C_in)          depthwise taps per channel (VMEM resident)
    wpw_ref   : (C_in, C_out_pad)  pointwise weight (VMEM resident)
    bfused_ref: (1, C_out_pad)     fused bias (b_dw @ w_pw + b_pw), f32
    o_ref     : (T_tile, C_out_pad) output time tile
    xpad_ref  : (T_scratch, C_in)  zero-padded input scratch; scratch row j holds
                                   padded time row j, data occupies rows [P, P+T)
    dma_sem   : DMA semaphore for the once-per-batch HBM->scratch copy
    """
    b = pl.program_id(0)
    t = pl.program_id(1)

    # Build the zero-padded input in VMEM once per batch element: one direct
    # HBM -> VMEM DMA of the unpadded slab (no padded HBM copy, no VMEM->VMEM copy,
    # no auto-pipelined second copy of x).  Zero fills overlap the DMA.
    @pl.when(t == 0)
    def _():
        cp = pltpu.make_async_copy(x_hbm.at[b], xpad_ref.at[P:P + T, :], dma_sem)
        cp.start()
        if P > 0:
            xpad_ref[0:P, :] = jnp.zeros((P, C_in), xpad_ref.dtype)
        tail = xpad_ref.shape[0] - (P + T)
        if tail > 0:
            xpad_ref[P + T:, :] = jnp.zeros((tail, C_in), xpad_ref.dtype)
        cp.wait()

    # shift == 0, so the tile base is always 8-sublane aligned (t_tile % 8 == 0).
    base = pl.multiple_of(t * T_tile, 8)

    # Depthwise conv along time: y[i, c] = sum_k xpad[base + i + k, c] * wdw[k, c].
    # Stays in the input dtype (bf16 stays bf16 on v6e/v7x).  The per-tap weight
    # broadcasts are hoisted out of the unrolled MAC chain.
    wdw = wdw_ref[...]                                                # (K, C_in)
    taps = [jnp.broadcast_to(wdw[k:k + 1, :], (T_tile, C_in)) for k in range(K)]
    y = xpad_ref[pl.ds(base, T_tile), :] * taps[0]
    for k in range(1, K):                      # K is small; static unrolled loop
        y = y + xpad_ref[pl.ds(base + k, T_tile), :] * taps[k]

    # Pointwise 1x1 conv == channel matmul (MXU, f32 accumulate) + fused bias.
    out = jnp.dot(y, wpw_ref[...], preferred_element_type=jnp.float32)
    out = out + bfused_ref[...]
    o_ref[...] = out.astype(o_ref.dtype)


def sep_conv(x, w_dw, b_dw, w_pw, b_pw, *, padding, t_tile=256):
    """x: (B, T, C_in). Returns (B, T_out, C_out), T_out = T + 2*padding - K + 1.

    w_dw: (K, C_in) depthwise taps, b_dw: (C_in,), w_pw: (C_in, C_out), b_pw: (C_out,).
    """
    B, T, C_in = x.shape
    K = w_dw.shape[0]
    C_out = w_pw.shape[1]
    P = int(padding)
    T_out = T + 2 * P - K + 1
    assert T_out >= 1, "kernel/padding combination produces empty output"

    # Time tile: as big as reasonable (per-step overhead ~0.35us; longer MXU LHS;
    # larger unmasked output stores).  Must be a multiple of 8 unless it covers T_out.
    t_tile = min(t_tile, T_out)
    if t_tile < T_out:
        t_tile = max(8, (t_tile // 8) * 8)
    num_t = pl.cdiv(T_out, t_tile)

    # Lane-dense output channels: pad C_out up to a multiple of 128 so the output
    # stores are unmasked; slice afterwards.  (Padding C_in would need an HBM copy
    # of x, so non-multiple-of-128 C_in is left as-is — correct, just lane-padded.)
    C_out_pad = C_out if C_out % 128 == 0 else ((C_out + 127) // 128) * 128

    # Padded-input scratch: sized so every tap slice of every time tile (including
    # the partial last tile) stays in bounds.  num_t*t_tile + K - 1 >= P + T always.
    T_scratch = num_t * t_tile + K - 1

    # Fold the depthwise bias into the pointwise bias (removes a per-step VPU add).
    w_pw_f32 = w_pw.astype(jnp.float32)
    b_fused = b_dw.astype(jnp.float32) @ w_pw_f32 + b_pw.astype(jnp.float32)
    if C_out_pad != C_out:
        w_pw = jnp.pad(w_pw, ((0, 0), (0, C_out_pad - C_out)))
        b_fused = jnp.pad(b_fused, (0, C_out_pad - C_out))
    b_fused = b_fused.reshape(1, C_out_pad)

    # Derive the VMEM limit from the actual footprint (v7x has only 64 MiB physical).
    itemsize = x.dtype.itemsize
    w_isize = w_pw.dtype.itemsize
    vmem_need = (T_scratch * C_in * itemsize                       # padded input scratch
                 + 2 * t_tile * C_out_pad * itemsize               # double-buffered out
                 + 2 * (K * C_in + C_in * C_out_pad) * w_isize     # resident weights
                 + 2 * C_out_pad * 4)                              # fused bias
    vmem_limit = int(min(100 * 2**20, max(32 * 2**20, vmem_need * 5 // 4 + (2 << 20))))

    flops = 2 * B * T_out * C_in * (K + C_out)
    bytes_accessed = (B * T * C_in * itemsize + B * T_out * C_out * itemsize
                      + (K * C_in + C_in * C_out + C_out) * w_isize)
    cost = pl.CostEstimate(flops=flops, transcendentals=0,
                           bytes_accessed=bytes_accessed)

    kernel = functools.partial(_sepconv_kernel, K=K, P=P, T=T, T_tile=t_tile,
                               C_in=C_in)

    out = pl.pallas_call(
        kernel,
        out_shape=jax.ShapeDtypeStruct((B, T_out, C_out_pad), x.dtype),
        grid=(B, num_t),
        in_specs=[
            # Input stays in HBM; the kernel DMAs it into the padded scratch itself.
            pl.BlockSpec(memory_space=pl.ANY),
            # Weights / fused bias: constant index_map -> VMEM resident, no per-step DMA.
            pl.BlockSpec((K, C_in), lambda b, t: (0, 0)),
            pl.BlockSpec((C_in, C_out_pad), lambda b, t: (0, 0)),
            pl.BlockSpec((1, C_out_pad), lambda b, t: (0, 0)),
        ],
        out_specs=pl.BlockSpec((pl.Squeezed(), t_tile, C_out_pad),
                               lambda b, t: (b, t, 0)),
        scratch_shapes=[
            pltpu.VMEM((T_scratch, C_in), x.dtype),
            pltpu.SemaphoreType.DMA(()),
        ],
        compiler_params=pltpu.CompilerParams(
            # Batch axis "parallel" (megacore/2-TC sharding); the time-tile axis must
            # be "arbitrary" because the padded-input scratch is filled at t == 0 and
            # reused by the later tiles of the same batch element.
            dimension_semantics=("parallel", "arbitrary"),
            vmem_limit_bytes=vmem_limit,
        ),
        cost_estimate=cost,
    )(x, w_dw, w_pw, b_fused)

    if C_out_pad != C_out:
        out = out[..., :C_out]
    return out


def sep_conv_ref(x, w_dw, b_dw, w_pw, b_pw, *, padding):
    """Pure-JAX reference mirroring the PyTorch module."""
    B, T, C_in = x.shape
    K = w_dw.shape[0]
    T_out = T + 2 * padding - K + 1
    xp = jnp.pad(x.astype(jnp.float32), ((0, 0), (padding, padding), (0, 0)))
    y = jnp.zeros((B, T_out, C_in), jnp.float32)
    for k in range(K):
        y = y + xp[:, k:k + T_out, :] * w_dw[k][None, None, :]
    y = y + b_dw[None, None, :]
    out = jnp.einsum("btc,cd->btd", y, w_pw.astype(jnp.float32)) + b_pw[None, None, :]
    return out.astype(x.dtype)


if __name__ == "__main__":
    def run_case(key, B, T, C_in, C_out, K, P, t_tile):
        k_x, k_wdw, k_bdw, k_wpw, k_bpw = jax.random.split(key, 5)
        x = jax.random.normal(k_x, (B, T, C_in), dtype=jnp.float32)
        # conv1 (depthwise): PyTorch weight (C_in, 1, 1, K) + bias (C_in,), stored
        # here as (K, C_in) taps.  conv2 (pointwise): PyTorch (C_out, C_in, 1, 1) +
        # bias (C_out,), stored transposed as (C_in, C_out).
        w_dw = jax.random.normal(k_wdw, (K, C_in), dtype=jnp.float32) * 0.1
        b_dw = jax.random.normal(k_bdw, (C_in,), dtype=jnp.float32) * 0.1
        w_pw = jax.random.normal(k_wpw, (C_in, C_out), dtype=jnp.float32) * 0.1
        b_pw = jax.random.normal(k_bpw, (C_out,), dtype=jnp.float32) * 0.1

        out = sep_conv(x, w_dw, b_dw, w_pw, b_pw, padding=P, t_tile=t_tile)
        out = jax.block_until_ready(out)
        ref = sep_conv_ref(x, w_dw, b_dw, w_pw, b_pw, padding=P)
        T_out = T + 2 * P - K + 1
        assert out.shape == (B, T_out, C_out), out.shape
        assert jnp.allclose(out, ref, atol=1e-3, rtol=1e-3), "mismatch vs reference"

    key = jax.random.PRNGKey(0)
    k1, k2, k3 = jax.random.split(key, 3)
    # Lane-dense channels, two time tiles per batch element ("same" padding).
    run_case(k1, B=2, T=128, C_in=128, C_out=128, K=3, P=1, t_tile=64)
    # Wider depthwise kernel + non-128 channel counts (exercises C_out lane padding).
    run_case(k2, B=2, T=192, C_in=64, C_out=96, K=5, P=2, t_tile=64)
    # Single-tile path (t_tile clamps to T_out) with the default tile size.
    run_case(k3, B=1, T=96, C_in=128, C_out=128, K=3, P=1, t_tile=256)

    print("KERNEL_OK")
</pallas_src>

<mosaic_0001>
module attributes {stable_mosaic.version = 11 : i64} {
  func.func @_sepconv_kernel(%arg0: i32, %arg1: i32, %arg2: memref<2x128x128xf32, #tpu.memory_space<any>>, %arg3: memref<3x128xf32, #tpu.memory_space<vmem>>, %arg4: memref<128x128xf32, #tpu.memory_space<vmem>>, %arg5: memref<1x128xf32, #tpu.memory_space<vmem>>, %arg6: memref<1x64x128xf32, #tpu.memory_space<vmem>>, %arg7: memref<130x128xf32, #tpu.memory_space<vmem>>, %arg8: memref<!tpu.dma_semaphore, #tpu.memory_space<semaphore_mem>>) attributes {dimension_semantics = [#tpu.dimension_semantics<parallel>, #tpu.dimension_semantics<arbitrary>], iteration_bounds = array<i64: 2, 2>, scalar_prefetch = 0 : i64, scratch_operands = 2 : i64, tpu.core_type = #tpu.core_type<tc>, window_params = [{}, {pipeline_mode = #tpu.pipeline_mode<synchronous>, transform_indices = @transform_1, window_bounds = array<i64: 3, 128>}, {pipeline_mode = #tpu.pipeline_mode<synchronous>, transform_indices = @transform_2, window_bounds = array<i64: 128, 128>}, {pipeline_mode = #tpu.pipeline_mode<synchronous>, transform_indices = @transform_3, window_bounds = array<i64: 1, 128>}, {transform_indices = @transform_4, window_bounds = array<i64: 1, 64, 128>}]} {
    %c0_i32 = arith.constant 0 : i32
    %0 = arith.cmpi eq, %arg1, %c0_i32 : i32
    %1 = arith.extui %0 : i1 to i32
    %c0_i32_0 = arith.constant 0 : i32
    %2 = arith.cmpi ne, %1, %c0_i32_0 : i32
    scf.if %2 {
      %c0_i32_12 = arith.constant 0 : i32
      %c0_i32_13 = arith.constant 0 : i32
      %36 = tpu.memref_slice %arg2[%arg0, %c0_i32_12, %c0_i32_13] : memref<2x128x128xf32, #tpu.memory_space<any>> -> memref<1x128x128xf32, #tpu.memory_space<any>>
      %37 = tpu.memref_squeeze %36 : memref<1x128x128xf32, #tpu.memory_space<any>> -> memref<128x128xf32, #tpu.memory_space<any>>
      %c1_i32_14 = arith.constant 1 : i32
      %c0_i32_15 = arith.constant 0 : i32
      %38 = tpu.memref_slice %arg7[%c1_i32_14, %c0_i32_15] : memref<130x128xf32, #tpu.memory_space<vmem>> -> memref<128x128xf32, #tpu.memory_space<vmem>>
      tpu.enqueue_dma source(%37 : memref<128x128xf32, #tpu.memory_space<any>>) target(%38 : memref<128x128xf32, #tpu.memory_space<vmem>>) target_semaphore(%arg8 : memref<!tpu.dma_semaphore, #tpu.memory_space<semaphore_mem>>)
      %cst_16 = arith.constant 0.000000e+00 : f32
      %39 = vector.broadcast %cst_16 : f32 to vector<1x128xf32>
      %c0_17 = arith.constant 0 : index
      %c0_18 = arith.constant 0 : index
      %40 = vector.load %arg7[%c0_17, %c0_18] : memref<130x128xf32, #tpu.memory_space<vmem>>, vector<1x128xf32>
      tpu.vector_store %arg7[%c0_17, %c0_18], %39 {strides = array<i32>} : memref<130x128xf32, #tpu.memory_space<vmem>>, vector<1x128xf32>,
      %cst_19 = arith.constant 0.000000e+00 : f32
      %41 = vector.broadcast %cst_19 : f32 to vector<1x128xf32>
      %c129 = arith.constant 129 : index
      %c0_20 = arith.constant 0 : index
      %42 = vector.load %arg7[%c129, %c0_20] : memref<130x128xf32, #tpu.memory_space<vmem>>, vector<1x128xf32>
      tpu.vector_store %arg7[%c129, %c0_20], %41 {strides = array<i32>} : memref<130x128xf32, #tpu.memory_space<vmem>>, vector<1x128xf32>,
      %c0_i32_21 = arith.constant 0 : i32
      %c0_i32_22 = arith.constant 0 : i32
      %43 = tpu.memref_slice %arg2[%arg0, %c0_i32_21, %c0_i32_22] : memref<2x128x128xf32, #tpu.memory_space<any>> -> memref<1x128x128xf32, #tpu.memory_space<any>>
      %44 = tpu.memref_squeeze %43 : memref<1x128x128xf32, #tpu.memory_space<any>> -> memref<128x128xf32, #tpu.memory_space<any>>
      %c1_i32_23 = arith.constant 1 : i32
      %c0_i32_24 = arith.constant 0 : i32
      %45 = tpu.memref_slice %arg7[%c1_i32_23, %c0_i32_24] : memref<130x128xf32, #tpu.memory_space<vmem>> -> memref<128x128xf32, #tpu.memory_space<vmem>>
      tpu.wait_dma2 semaphore(%arg8 : memref<!tpu.dma_semaphore, #tpu.memory_space<semaphore_mem>>) src(%44 : memref<128x128xf32, #tpu.memory_space<any>>) dst(%45 : memref<128x128xf32, #tpu.memory_space<vmem>>)
    } else {
    }
    %c64_i32 = arith.constant 64 : i32
    %3 = arith.muli %arg1, %c64_i32 : i32
    %4 = tpu.assume_multiple %3, 8 : i32
    %c0 = arith.constant 0 : index
    %c0_1 = arith.constant 0 : index
    %5 = vector.load %arg3[%c0, %c0_1] : memref<3x128xf32, #tpu.memory_space<vmem>>, vector<3x128xf32>
    %6 = vector.extract_strided_slice %5 {offsets = [0, 0], sizes = [1, 128], strides = [1, 1]} : vector<3x128xf32> to vector<1x128xf32>
    %7 = vector.shape_cast %6 : vector<1x128xf32> to vector<1x128xf32>
    %8 = vector.broadcast %7 : vector<1x128xf32> to vector<64x128xf32>
    %9 = vector.extract_strided_slice %5 {offsets = [1, 0], sizes = [1, 128], strides = [1, 1]} : vector<3x128xf32> to vector<1x128xf32>
    %10 = vector.shape_cast %9 : vector<1x128xf32> to vector<1x128xf32>
    %11 = vector.broadcast %10 : vector<1x128xf32> to vector<64x128xf32>
    %12 = vector.extract_strided_slice %5 {offsets = [2, 0], sizes = [1, 128], strides = [1, 1]} : vector<3x128xf32> to vector<1x128xf32>
    %13 = vector.shape_cast %12 : vector<1x128xf32> to vector<1x128xf32>
    %14 = vector.broadcast %13 : vector<1x128xf32> to vector<64x128xf32>
    %15 = arith.index_cast %4 : i32 to index
    %c0_2 = arith.constant 0 : index
    %16 = vector.load %arg7[%15, %c0_2] : memref<130x128xf32, #tpu.memory_space<vmem>>, vector<64x128xf32>
    %17 = arith.mulf %16, %8 : vector<64x128xf32>
    %c1_i32 = arith.constant 1 : i32
    %18 = arith.addi %4, %c1_i32 : i32
    %19 = arith.index_cast %18 : i32 to index
    %c0_3 = arith.constant 0 : index
    %20 = vector.load %arg7[%19, %c0_3] : memref<130x128xf32, #tpu.memory_space<vmem>>, vector<64x128xf32>
    %21 = arith.mulf %20, %11 : vector<64x128xf32>
    %22 = arith.addf %17, %21 : vector<64x128xf32>
    %c2_i32 = arith.constant 2 : i32
    %23 = arith.addi %4, %c2_i32 : i32
    %24 = arith.index_cast %23 : i32 to index
    %c0_4 = arith.constant 0 : index
    %25 = vector.load %arg7[%24, %c0_4] : memref<130x128xf32, #tpu.memory_space<vmem>>, vector<64x128xf32>
    %26 = arith.mulf %25, %14 : vector<64x128xf32>
    %27 = arith.addf %22, %26 : vector<64x128xf32>
    %c0_5 = arith.constant 0 : index
    %c0_6 = arith.constant 0 : index
    %28 = vector.load %arg4[%c0_5, %c0_6] : memref<128x128xf32, #tpu.memory_space<vmem>>, vector<128x128xf32>
    %cst = arith.constant dense<0.000000e+00> : vector<64x128xf32>
    %29 = tpu.matmul %27, %28, %cst {dimension_numbers = #tpu.dot_dimension_numbers<[1], [0], [0], [1], [0, 0, 1, 1], [], []>} : vector<64x128xf32>, vector<128x128xf32>, vector<64x128xf32> -> vector<64x128xf32>
    %c0_7 = arith.constant 0 : index
    %c0_8 = arith.constant 0 : index
    %30 = vector.load %arg5[%c0_7, %c0_8] : memref<1x128xf32, #tpu.memory_space<vmem>>, vector<1x128xf32>
    %31 = vector.broadcast %30 : vector<1x128xf32> to vector<64x128xf32>
    %32 = arith.addf %29, %31 : vector<64x128xf32>
    %c0_9 = arith.constant 0 : index
    %c0_10 = arith.constant 0 : index
    %c0_11 = arith.constant 0 : index
    %33 = vector.load %arg6[%c0_9, %c0_10, %c0_11] : memref<1x64x128xf32, #tpu.memory_space<vmem>>, vector<1x64x128xf32>
    %34 = vector.shape_cast %33 : vector<1x64x128xf32> to vector<64x128xf32>
    %35 = vector.shape_cast %32 : vector<64x128xf32> to vector<1x64x128xf32>
    tpu.vector_store %arg6[%c0_9, %c0_10, %c0_11], %35 {strides = array<i32>} : memref<1x64x128xf32, #tpu.memory_space<vmem>>, vector<1x64x128xf32>,
    return
  }
  func.func @transform_1(%arg0: i32, %arg1: i32) -> (i32, i32) {
    %c0_i32 = arith.constant 0 : i32
    %c0_i32_0 = arith.constant 0 : i32
    %c0_i32_1 = arith.constant 0 : i32
    return %c0_i32, %c0_i32_0 : i32, i32
  }
  func.func @transform_2(%arg0: i32, %arg1: i32) -> (i32, i32) {
    %c0_i32 = arith.constant 0 : i32
    %c0_i32_0 = arith.constant 0 : i32
    %c0_i32_1 = arith.constant 0 : i32
    return %c0_i32, %c0_i32_0 : i32, i32
  }
  func.func @transform_3(%arg0: i32, %arg1: i32) -> (i32, i32) {
    %c0_i32 = arith.constant 0 : i32
    %c0_i32_0 = arith.constant 0 : i32
    %c0_i32_1 = arith.constant 0 : i32
    return %c0_i32, %c0_i32_0 : i32, i32
  }
  func.func @transform_4(%arg0: i32, %arg1: i32) -> (i32, i32, i32) {
    %c0_i32 = arith.constant 0 : i32
    %c0_i32_0 = arith.constant 0 : i32
    return %arg0, %arg1, %c0_i32 : i32, i32, i32
  }
}

</mosaic_0001>

<llo_original>
// kernel: tpu_custom_call.1
$region0: #{tpu_custom_call.1}
  #allocation0 [shape = 'u32[]', space=smem, size = 0x4, offset = 0x4, fixed_abs, tag = 'smem constant byte address 0x4 - core index']
  #allocation1 [shape = 'u32[144,128]{1,0:T(1,128)}', space=vmem, size = 0x12000, scoped, tag = 'internal scratch']
  #allocation2 [shape = 'f32[130,128]{1,0:T(8,128)}', space=vmem, size = 0x11000, scoped, tag = 'scratch operand']
  #allocation3 [shape = 's32[1]{0}', space=sflag, size = 0x4, scoped, tag = 'scratch operand']
  #allocation10 [shape = 's32[]', space=sflag, size = 0x4, offset = 0, fixed_abs, tag = 'sflag constant byte address 0x0 - dummy sync flag']
  #allocation11 [shape = 's32[]', space=sflag, size = 0x4, offset = 0, fixed_abs, tag = 'sflag constant byte address 0x0 - dummy sync flag']
  #allocation12 [shape = 'u32[]', space=smem, size = 0x4, offset = 0x44, fixed_abs, tag = 'smem constant byte address 0x44 - assertion arg 0']
  #allocation13 [shape = 'u32[]', space=smem, size = 0x4, offset = 0x48, fixed_abs, tag = 'smem constant byte address 0x48 - assertion arg 1']
  %s0 = inlined_call_operand.hbm [shape: f32[2,128,128], index: 0, kind: input, shape index: {}]
  %s1 = inlined_call_operand.hbm [shape: f32[3,128], index: 1, kind: input, shape index: {}]
  %s2 = inlined_call_operand.hbm [shape: f32[128,128], index: 2, kind: input, shape index: {}]
  %s3 = inlined_call_operand.vmem [shape: f32[1,128], index: 3, kind: input, shape index: {}]
  %s4 = inlined_call_operand.hbm [shape: f32[2,128,128], index: 4, kind: output, shape index: {}]
  %s5 = sld [smem:[#allocation0]]
  $region61: #{tpu_custom_call.1} parent=0
    _
  %s7 = ssub.s32 1, %s5
  %s8 = scalar_select 0, %s7, %s5
  $region1: #{tpu_custom_call.1} parent=0
    #allocation4 [shape = 'u8[2048]{0}', space=vmem, size = 0x800, scoped, tag = 'input window, operand 1, single buffered']
    #allocation5 [shape = 's32[2]{0}', space=sflag, size = 0x8, scoped, tag = 'scoped memory for tpu_custom_call.1']
    #allocation6 [shape = 's32[2]{0}', space=sflag, size = 0x8, scoped, tag = 'scoped memory for tpu_custom_call.1']
    #allocation7 [shape = 'u8[65536]{0}', space=vmem, size = 0x10000, scoped, tag = 'input window, operand 2, single buffered']
    #allocation8 [shape = 's32[1]{0}', space=sflag, size = 0x4, scoped, tag = 'scoped memory for tpu_custom_call.1']
    #allocation9 [shape = 'u8[65536]{0}', space=vmem, size = 0x10000, scoped, tag = 'output window, operand 0']
    %9 = vsyncpa [#allocation5], 0
    %10 = vsyncpa [#allocation8], 0
    %11 = vsyncpa [#allocation6], 0
    %s12 = scalar_lea.sflag [#allocation6], 1
    %13 = vsyncpa %s12, 0
    loop: start=0, step=1, limit=6
    $region2: #{tpu_custom_call.1} parent=1 // loop_pre_header
      _
    $region3: #{tpu_custom_call.1} parent=1 // loop_header
      %s15 = sphi 0, %s19
      %p16 = scmp.ge.s32.totalorder %s15, 6
      %s22 = sphi 0, %s34
      %s23 = sphi 0, %s30
      %s24 = sphi 0, %s22
      %s25 = sphi 0, %s23
      %s26 = sphi 0, %s24
      %s27 = sphi 0, %s25
      %s35 = sphi 0, %s35
      %s37 = sphi 0, %s35
      %s38 = sphi 0, %s37
      %s52 = sphi 0, %s38
      %s56 = sphi 0, %s56
      %s58 = sphi 0, %s56
      %s59 = sphi 0, %s58
      %s73 = sphi 0, %s59
      %s77 = sphi 0, %s77
      %s79 = sphi 0, %s77
      %s80 = sphi 0, %s79
      %s94 = sphi 0, %s80
      %s102 = sphi 0, %s104
      %s105 = sphi 0, %s102
      %s106 = sphi 0, %s105
      %s122 = sphi 0, %s106
    $region4: #{tpu_custom_call.1} parent=1 // loop_header_branch
      %18 = sbr.rel (%p16) target = $region8
    $region5: #{tpu_custom_call.1} parent=1 // loop_body
      %s20 = ssub.s32 %s15, 1
      %s21 = ssub.s32 %s15, 2
      %s28 = sadd.s32 1, %s23
      %p29 = scmp.ge.s32.totalorder %s28, 2
      %s30 = scalar_select %p29, 0, %s28
      %s31 = sadd.s32 1, %s22
      %s32 = scalar_select %p29, %s31, %s22
      %p33 = scmp.ge.s32.totalorder %s32, 2
      %s34 = scalar_select %p33, 0, %s32
      %s36 = sadd.s32 %s35, 1
      %p39 = scmp.eq.s32.totalorder %s15, 3
      %p40 = scmp.ne.s32.totalorder %s35, %s37
      %p41 = scmp.eq.s32.totalorder %s15, 0
      %p42 = por %p40, %p41
      %p43 = scmp.ne.s32.totalorder %s35, %s37
      %p44 = scmp.eq.s32.totalorder %s20, 3
      %p45 = por %p43, %p44
      %p46 = scmp.ne.s32.totalorder %s37, %s38
      %p47 = scmp.eq.s32.totalorder %s20, 0
      %p48 = por %p46, %p47
      %p49 = scmp.ne.s32.totalorder %s37, %s38
      %p50 = scmp.eq.s32.totalorder %s21, 3
      %p51 = por %p49, %p50
      %p53 = scmp.ne.s32.totalorder %s38, %s52
      %p54 = scmp.eq.s32.totalorder %s21, 0
      %p55 = por %p53, %p54
      %s57 = sadd.s32 %s56, 1
      %p60 = scmp.eq.s32.totalorder %s15, 3
      %p61 = scmp.ne.s32.totalorder %s56, %s58
      %p62 = scmp.eq.s32.totalorder %s15, 0
      %p63 = por %p61, %p62
      %p64 = scmp.ne.s32.totalorder %s56, %s58
      %p65 = scmp.eq.s32.totalorder %s20, 3
      %p66 = por %p64, %p65
      %p67 = scmp.ne.s32.totalorder %s58, %s59
      %p68 = scmp.eq.s32.totalorder %s20, 0
      %p69 = por %p67, %p68
      %p70 = scmp.ne.s32.totalorder %s58, %s59
      %p71 = scmp.eq.s32.totalorder %s21, 3
      %p72 = por %p70, %p71
      %p74 = scmp.ne.s32.totalorder %s59, %s73
      %p75 = scmp.eq.s32.totalorder %s21, 0
      %p76 = por %p74, %p75
      %s78 = sadd.s32 %s77, 1
      %p81 = scmp.eq.s32.totalorder %s15, 3
      %p82 = scmp.ne.s32.totalorder %s77, %s79
      %p83 = scmp.eq.s32.totalorder %s15, 0
      %p84 = por %p82, %p83
      %p85 = scmp.ne.s32.totalorder %s77, %s79
      %p86 = scmp.eq.s32.totalorder %s20, 3
      %p87 = por %p85, %p86
      %p88 = scmp.ne.s32.totalorder %s79, %s80
      %p89 = scmp.eq.s32.totalorder %s20, 0
      %p90 = por %p88, %p89
      %p91 = scmp.ne.s32.totalorder %s79, %s80
      %p92 = scmp.eq.s32.totalorder %s21, 3
      %p93 = por %p91, %p92
      %p95 = scmp.ne.s32.totalorder %s80, %s94
      %p96 = scmp.eq.s32.totalorder %s21, 0
      %p97 = por %p95, %p96
      %s98 = ssub.s32 %s22, %s34
      %s99 = ssub.s32 %s23, %s30
      %s100 = sor.u32 %s98, %s99
      %p101 = scmp.eq.s32.totalorder %s100, 0
      %s103 = sadd.s32 %s102, 1
      %s104 = scalar_select %p101, %s102, %s103
      %p107 = pneg %p101
      %p108 = scmp.eq.s32.totalorder %s15, 3
      %p109 = por %p107, %p108
      %p110 = scmp.ne.s32.totalorder %s102, %s105
      %p111 = scmp.eq.s32.totalorder %s15, 0
      %p112 = por %p110, %p111
      %p113 = scmp.ne.s32.totalorder %s102, %s105
      %p114 = scmp.eq.s32.totalorder %s20, 3
      %p115 = por %p113, %p114
      %p116 = scmp.ne.s32.totalorder %s105, %s106
      %p117 = scmp.eq.s32.totalorder %s20, 0
      %p118 = por %p116, %p117
      %p119 = scmp.ne.s32.totalorder %s105, %s106
      %p120 = scmp.eq.s32.totalorder %s21, 3
      %p121 = por %p119, %p120
      %p123 = scmp.ne.s32.totalorder %s106, %s122
      %p124 = scmp.eq.s32.totalorder %s21, 0
      %p125 = por %p123, %p124
      %p126 = scmp.le.s32.totalorder 1, %s15
      %p127 = scmp.lt.s32.totalorder %s15, 5
      %p128 = pnand %p126, %p127
      %p129 = pneg %p128
      // Predicated region
      $region9: #{tpu_custom_call.1} parent=5 // pred_check
        _
      $region10: #{tpu_custom_call.1} parent=5 // pred_check_branch
        %131 = sbr.rel (%p128) target = $region12
      $region11: #{tpu_custom_call.1} parent=5 // pred_region
        %s132 = ssub.s32 %s15, 1
        // Predicated region
        $region13: #{tpu_custom_call.1} parent=11 // pred_check
          %p133 = pneg %p48
        $region14: #{tpu_custom_call.1} parent=11 // pred_check_branch
          %135 = sbr.rel (%p133) target = $region16
        $region15: #{tpu_custom_call.1} parent=11 // pred_region
          %s137 = ssub.s32 64, 64
          %138 = vsyncadd [#allocation5], %s137
          %s140 = sshll.u32 [#allocation4], 4
          %s141 = int_to_ptr.vmem [resolvable:$true] %s140
          %143 = dma.hbm_to_vmem [thread:$0]  %s1, 64, %s141, [#allocation5]
        $region16: #{tpu_custom_call.1} parent=11 // pred_fallthru
          _
        // Predicated region
        $region17: #{tpu_custom_call.1} parent=11 // pred_check
          %p144 = pneg %p69
        $region18: #{tpu_custom_call.1} parent=11 // pred_check_branch
          %146 = sbr.rel (%p144) target = $region20
        $region19: #{tpu_custom_call.1} parent=11 // pred_region
          %s148 = ssub.s32 2048, 2048
          %149 = vsyncadd [#allocation8], %s148
          %s150 = sshll.u32 [#allocation7], 4
          %s151 = int_to_ptr.vmem [resolvable:$true] %s150
          %156 = dma.hbm_to_vmem [thread:$0]  %s2, 2048, %s151, [#allocation8], 128, 128, 8
        $region20: #{tpu_custom_call.1} parent=11 // pred_fallthru
          _
        // Predicated region
        $region21: #{tpu_custom_call.1} parent=11 // pred_check
          %p157 = pneg %p90
        $region22: #{tpu_custom_call.1} parent=11 // pred_check_branch
          %159 = sbr.rel (%p157) target = $region24
        $region23: #{tpu_custom_call.1} parent=11 // pred_region
          _
        $region24: #{tpu_custom_call.1} parent=11 // pred_fallthru
          _
      $region12: #{tpu_custom_call.1} parent=5 // pred_fallthru
        _
      %p160 = scmp.lt.s32.totalorder %s15, 4
      // Predicated region
      $region25: #{tpu_custom_call.1} parent=5 // pred_check
        %p161 = pneg %p160
      $region26: #{tpu_custom_call.1} parent=5 // pred_check_branch
        %163 = sbr.rel (%p161) target = $region28
      $region27: #{tpu_custom_call.1} parent=5 // pred_region
        _
      $region28: #{tpu_custom_call.1} parent=5 // pred_fallthru
        _
      %p164 = scmp.le.s32.totalorder 1, %s15
      %p165 = scmp.lt.s32.totalorder %s15, 5
      %p166 = pnand %p164, %p165
      %p167 = pneg %p166
      // Predicated region
      $region29: #{tpu_custom_call.1} parent=5 // pred_check
        _
      $region30: #{tpu_custom_call.1} parent=5 // pred_check_branch
        %169 = sbr.rel (%p166) target = $region32
      $region31: #{tpu_custom_call.1} parent=5 // pred_region
        %s170 = ssub.s32 %s15, 1
        // Predicated region
        $region33: #{tpu_custom_call.1} parent=31 // pred_check
          %p171 = pneg %p48
        $region34: #{tpu_custom_call.1} parent=31 // pred_check_branch
          %173 = sbr.rel (%p171) target = $region36
        $region35: #{tpu_custom_call.1} parent=31 // pred_region
          %174 = dma.done [#allocation5], 64
        $region36: #{tpu_custom_call.1} parent=31 // pred_fallthru
          _
        // Predicated region
        $region37: #{tpu_custom_call.1} parent=31 // pred_check
          %p175 = pneg %p69
        $region38: #{tpu_custom_call.1} parent=31 // pred_check_branch
          %177 = sbr.rel (%p175) target = $region40
        $region39: #{tpu_custom_call.1} parent=31 // pred_region
          %178 = dma.done [#allocation8], 2048
        $region40: #{tpu_custom_call.1} parent=31 // pred_fallthru
          _
        %p179 = pneg %p48
        %p180 = pneg %p45
        %p181 = pneg %p69
        %p182 = pneg %p66
        %p183 = pneg %p90
        %p184 = pneg %p87
        %p185 = pneg %p118
        %p186 = pneg %p115
        %s187 = sand.u32 %s105, 1
        %s188 = scalar_lea.sflag [#allocation6], %s187
        %s189 = sand.u32 %s105, 1
        %s190 = smul.addr %s189, 64
        %s191 = scalar_lea.vmem [#allocation9], %s190
        %s192 = smul.u32 8, %s25
        %p193 = scmp.eq.s32.totalorder %s25, 0
        // Predicated region
        $region41: #{tpu_custom_call.1} parent=31 // pred_check
          %p194 = pneg %p193
        $region42: #{tpu_custom_call.1} parent=31 // pred_check_branch
          %196 = sbr.rel (%p194) target = $region44
        $region43: #{tpu_custom_call.1} parent=31 // pred_region
          %s197 = smul.u32 %s24, 128
          %s198 = smul.addr %s197, 16
          %s199 = scalar_lea.hbm %s0, %s198
          %s200 = scalar_lea.vmem [#allocation2], 1
          // Predicated region
          $region45: #{tpu_custom_call.1} parent=43 // pred_check
            _
          $region46: #{tpu_custom_call.1} parent=43 // pred_check_branch
            %202 = sbr.rel target = $region48
          $region47: #{tpu_custom_call.1} parent=43 // pred_region
            %203 = sst [smem:[#allocation12]] [#allocation11]
            %204 = sst [smem:[#allocation13]] [#allocation10]
          $region48: #{tpu_custom_call.1} parent=43 // pred_fallthru
            _
          %206 = shalt.err (0)
          %s208 = sshll.u32 %s200, 4
          %s209 = int_to_ptr.vmem [resolvable:$true] %s208
          %211 = dma.hbm_to_vmem [thread:$0]  %s199, 2048, %s209, [#allocation3]
          %212 = vst [vmem:[#allocation2] sm:$0x1] 0.0
          %213 = vst [vmem:[#allocation2 + $0x81] sm:$0x1] 0.0
          %s214 = smul.u32 128, 1
          %s215 = sshll.u32 %s214, 4
          %216 = dma.done [#allocation3], %s215
        $region44: #{tpu_custom_call.1} parent=31 // pred_fallthru
          _
        %s217 = smul.u32 %s25, 64
        %v218 = vld [vmem:[#allocation4] sm:$0x7]
        %v219 = vlaneseq
        %v220 = vshrl.u32 %v219, 7
        %v221 = vsub.s32 0, %v220
        %v222 = vrot.slane %v218, %v221
        %v223 = vlaneseq
        %v224 = vshrl.u32 %v223, 7
        %v225 = vsub.s32 1, %v224
        %v226 = vrot.slane %v218, %v225
        %v227 = vlaneseq
        %v228 = vshrl.u32 %v227, 7
        %v229 = vsub.s32 2, %v228
        %v230 = vrot.slane %v218, %v229
        %s231 = scalar_lea.vmem [#allocation2], %s217
        %v232 = vld [vmem:[%s231] sm:$0xff]
        %v233 = vld [vmem:[%s231 + $0x8] sm:$0xff]
        %v234 = vld [vmem:[%s231 + $0x10] sm:$0xff]
        %v235 = vld [vmem:[%s231 + $0x18] sm:$0xff]
        %v236 = vld [vmem:[%s231 + $0x20] sm:$0xff]
        %v237 = vld [vmem:[%s231 + $0x28] sm:$0xff]
        %v238 = vld [vmem:[%s231 + $0x30] sm:$0xff]
        %v239 = vld [vmem:[%s231 + $0x38] sm:$0xff]
        %v240 = vmul.f32 %v232, %v222
        %v241 = vmul.f32 %v233, %v222
        %v242 = vmul.f32 %v234, %v222
        %v243 = vmul.f32 %v235, %v222
        %v244 = vmul.f32 %v236, %v222
        %v245 = vmul.f32 %v237, %v222
        %v246 = vmul.f32 %v238, %v222
        %v247 = vmul.f32 %v239, %v222
        %s248 = sadd.s32 %s217, 1
        %s249 = scalar_lea.vmem [#allocation2], %s248
        %v250 = vld [vmem:[%s249] sm:$0xff]
        %v251 = vld [vmem:[%s249 + $0x8] sm:$0xff]
        %v252 = vld [vmem:[%s249 + $0x10] sm:$0xff]
        %v253 = vld [vmem:[%s249 + $0x18] sm:$0xff]
        %v254 = vld [vmem:[%s249 + $0x20] sm:$0xff]
        %v255 = vld [vmem:[%s249 + $0x28] sm:$0xff]
        %v256 = vld [vmem:[%s249 + $0x30] sm:$0xff]
        %v257 = vld [vmem:[%s249 + $0x38] sm:$0xff]
        %v258 = vmul.f32 %v250, %v226
        %v259 = vmul.f32 %v251, %v226
        %v260 = vmul.f32 %v252, %v226
        %v261 = vmul.f32 %v253, %v226
        %v262 = vmul.f32 %v254, %v226
        %v263 = vmul.f32 %v255, %v226
        %v264 = vmul.f32 %v256, %v226
        %v265 = vmul.f32 %v257, %v226
        %v266 = vadd.f32 %v240, %v258
        %v267 = vadd.f32 %v241, %v259
        %v268 = vadd.f32 %v242, %v260
        %v269 = vadd.f32 %v243, %v261
        %v270 = vadd.f32 %v244, %v262
        %v271 = vadd.f32 %v245, %v263
        %v272 = vadd.f32 %v246, %v264
        %v273 = vadd.f32 %v247, %v265
        %s274 = sadd.s32 %s217, 2
        %s275 = scalar_lea.vmem [#allocation2], %s274
        %v276 = vld [vmem:[%s275] sm:$0xff]
        %v277 = vld [vmem:[%s275 + $0x8] sm:$0xff]
        %v278 = vld [vmem:[%s275 + $0x10] sm:$0xff]
        %v279 = vld [vmem:[%s275 + $0x18] sm:$0xff]
        %v280 = vld [vmem:[%s275 + $0x20] sm:$0xff]
        %v281 = vld [vmem:[%s275 + $0x28] sm:$0xff]
        %v282 = vld [vmem:[%s275 + $0x30] sm:$0xff]
        %v283 = vld [vmem:[%s275 + $0x38] sm:$0xff]
        %v284 = vmul.f32 %v276, %v230
        %v285 = vmul.f32 %v277, %v230
        %v286 = vmul.f32 %v278, %v230
        %v287 = vmul.f32 %v279, %v230
        %v288 = vmul.f32 %v280, %v230
        %v289 = vmul.f32 %v281, %v230
        %v290 = vmul.f32 %v282, %v230
        %v291 = vmul.f32 %v283, %v230
        %v292 = vadd.f32 %v266, %v284
        %v293 = vadd.f32 %v267, %v285
        %v294 = vadd.f32 %v268, %v286
        %v295 = vadd.f32 %v269, %v287
        %v296 = vadd.f32 %v270, %v288
        %v297 = vadd.f32 %v271, %v289
        %v298 = vadd.f32 %v272, %v290
        %v299 = vadd.f32 %v273, %v291
        %v300 = vld [vmem:[#allocation7] sm:$0xff]
        %v301 = vld [vmem:[#allocation7 + $0x8] sm:$0xff]
        %v302 = vld [vmem:[#allocation7 + $0x10] sm:$0xff]
        %v303 = vld [vmem:[#allocation7 + $0x18] sm:$0xff]
        %v304 = vld [vmem:[#allocation7 + $0x20] sm:$0xff]
        %v305 = vld [vmem:[#allocation7 + $0x28] sm:$0xff]
        %v306 = vld [vmem:[#allocation7 + $0x30] sm:$0xff]
        %v307 = vld [vmem:[#allocation7 + $0x38] sm:$0xff]
        %v308 = vld [vmem:[#allocation7 + $0x40] sm:$0xff]
        %v309 = vld [vmem:[#allocation7 + $0x48] sm:$0xff]
        %v310 = vld [vmem:[#allocation7 + $0x50] sm:$0xff]
        %v311 = vld [vmem:[#allocation7 + $0x58] sm:$0xff]
        %v312 = vld [vmem:[#allocation7 + $0x60] sm:$0xff]
        %v313 = vld [vmem:[#allocation7 + $0x68] sm:$0xff]
        %v314 = vld [vmem:[#allocation7 + $0x70] sm:$0xff]
        %v315 = vld [vmem:[#allocation7 + $0x78] sm:$0xff]
        %v316 = vld [vmem:[%s3] sm:$0x1]
        %v318 = vlaneseq
        %v319 = vshrl.u32 %v318, 7
        %v320 = vsub.s32 0, %v319
        %v321 = vrot.slane %v316, %v320
        %323 = vmatprep.subr.mxu0 0.0
        %324 = vmatpush1.msra.mxu0 %v300
        %325 = vmatprep.subr.mxu0 0.0
        %326 = vmatpush1.msra.mxu0 %v301
        %327 = vmatprep.subr.mxu0 0.0
        %328 = vmatpush1.msra.mxu0 %v302
        %329 = vmatprep.subr.mxu0 0.0
        %330 = vmatpush1.msra.mxu0 %v303
        %331 = vmatprep.subr.mxu0 0.0
        %332 = vmatpush1.msra.mxu0 %v304
        %333 = vmatprep.subr.mxu0 0.0
        %334 = vmatpush1.msra.mxu0 %v305
        %335 = vmatprep.subr.mxu0 0.0
        %336 = vmatpush1.msra.mxu0 %v306
        %337 = vmatprep.subr.mxu0 0.0
        %338 = vmatpush1.msra.mxu0 %v307
        %339 = vmatprep.subr.mxu0 0.0
        %340 = vmatpush1.msra.mxu0 %v308
        %341 = vmatprep.subr.mxu0 0.0
        %342 = vmatpush1.msra.mxu0 %v309
        %343 = vmatprep.subr.mxu0 0.0
        %344 = vmatpush1.msra.mxu0 %v310
        %345 = vmatprep.subr.mxu0 0.0
        %346 = vmatpush1.msra.mxu0 %v311
        %347 = vmatprep.subr.mxu0 0.0
        %348 = vmatpush1.msra.mxu0 %v312
        %349 = vmatprep.subr.mxu0 0.0
        %350 = vmatpush1.msra.mxu0 %v313
        %351 = vmatprep.subr.mxu0 0.0
        %352 = vmatpush1.msra.mxu0 %v314
        %353 = vmatprep.subr.mxu0 0.0
        %354 = vmatpush1.msra.mxu0 %v315
        %355 = vmatprep.subr.mxu0 0.0
        %356 = vmatpush1.msra.mxu0 0.0
        %357 = vmatprep.subr.mxu0 0.0
        %358 = vmatpush1.msra.mxu0 0.0
        %359 = vmatprep.subr.mxu0 0.0
        %360 = vmatpush1.msra.mxu0 0.0
        %361 = vmatprep.subr.mxu0 0.0
        %362 = vmatpush1.msra.mxu0 0.0
        %363 = vmatprep.subr.mxu0 0.0
        %364 = vmatpush1.msra.mxu0 0.0
        %365 = vmatprep.subr.mxu0 0.0
        %366 = vmatpush1.msra.mxu0 0.0
        %367 = vmatprep.subr.mxu0 0.0
        %368 = vmatpush1.msra.mxu0 0.0
        %369 = vmatprep.subr.mxu0 0.0
        %370 = vmatpush1.msra.mxu0 0.0
        %371 = vmatprep.subr.mxu0 0.0
        %372 = vmatpush1.msra.mxu0 0.0
        %373 = vmatprep.subr.mxu0 0.0
        %374 = vmatpush1.msra.mxu0 0.0
        %375 = vmatprep.subr.mxu0 0.0
        %376 = vmatpush1.msra.mxu0 0.0
        %377 = vmatprep.subr.mxu0 0.0
        %378 = vmatpush1.msra.mxu0 0.0
        %379 = vmatprep.subr.mxu0 0.0
        %380 = vmatpush1.msra.mxu0 0.0
        %381 = vmatprep.subr.mxu0 0.0
        %382 = vmatpush1.msra.mxu0 0.0
        %383 = vmatprep.subr.mxu0 0.0
        %384 = vmatpush1.msra.mxu0 0.0
        %385 = vmatprep.subr.mxu0 0.0
        %386 = vmatpush1.msra.mxu0 0.0
        %387 = vmatprep.mubr.f32.mxu0 0.0
        %388 = vmatmul.mubr.f32.gmra.mrb[0].mxu0 %v292
        %v389 = vpop.f32.mrb[0].mxu0
        %v390 = vadd.f32 %v321, %v389
        %v391 = vpop.f32.mrb[0].mxu0
        %392 = vmatprep.mubr.f32.mxu0 0.0
        %393 = vmatmul.mubr.f32.gmra.mrb[0].mxu0 %v293
        %v394 = vpop.f32.mrb[0].mxu0
        %v395 = vadd.f32 %v321, %v394
        %v396 = vpop.f32.mrb[0].mxu0
        %397 = vmatprep.mubr.f32.mxu0 0.0
        %398 = vmatmul.mubr.f32.gmra.mrb[0].mxu0 %v294
        %v399 = vpop.f32.mrb[0].mxu0
        %v400 = vadd.f32 %v321, %v399
        %v401 = vpop.f32.mrb[0].mxu0
        %402 = vmatprep.mubr.f32.mxu0 0.0
        %403 = vmatmul.mubr.f32.gmra.mrb[0].mxu0 %v295
        %v404 = vpop.f32.mrb[0].mxu0
        %v405 = vadd.f32 %v321, %v404
        %v406 = vpop.f32.mrb[0].mxu0
        %407 = vmatprep.mubr.f32.mxu0 0.0
        %408 = vmatmul.mubr.f32.gmra.mrb[0].mxu0 %v296
        %v409 = vpop.f32.mrb[0].mxu0
        %v410 = vadd.f32 %v321, %v409
        %v411 = vpop.f32.mrb[0].mxu0
        %412 = vmatprep.mubr.f32.mxu0 0.0
        %413 = vmatmul.mubr.f32.gmra.mrb[0].mxu0 %v297
        %v414 = vpop.f32.mrb[0].mxu0
        %v415 = vadd.f32 %v321, %v414
        %v416 = vpop.f32.mrb[0].mxu0
        %417 = vmatprep.mubr.f32.mxu0 0.0
        %418 = vmatmul.mubr.f32.gmra.mrb[0].mxu0 %v298
        %v419 = vpop.f32.mrb[0].mxu0
        %v420 = vadd.f32 %v321, %v419
        %v421 = vpop.f32.mrb[0].mxu0
        %422 = vmatprep.mubr.f32.mxu0 0.0
        %423 = vmatmul.mubr.f32.gmra.mrb[0].mxu0 %v299
        %v424 = vpop.f32.mrb[0].mxu0
        %v425 = vadd.f32 %v321, %v424
        %v426 = vpop.f32.mrb[0].mxu0
        %427 = vdwg.mxu0
        %428 = vst [vmem:[%s191] sm:$0xff] %v390
        %429 = vst [vmem:[%s191 + $0x8] sm:$0xff] %v395
        %430 = vst [vmem:[%s191 + $0x10] sm:$0xff] %v400
        %431 = vst [vmem:[%s191 + $0x18] sm:$0xff] %v405
        %432 = vst [vmem:[%s191 + $0x20] sm:$0xff] %v410
        %433 = vst [vmem:[%s191 + $0x28] sm:$0xff] %v415
        %434 = vst [vmem:[%s191 + $0x30] sm:$0xff] %v420
        %435 = vst [vmem:[%s191 + $0x38] sm:$0xff] %v425
        %s436 = sand.u32 %s105, 1
        %s437 = scalar_lea.sflag [#allocation6], %s436
        %s438 = sand.u32 %s105, 1
        %s439 = smul.addr %s438, 64
        %s440 = scalar_lea.vmem [#allocation9], %s439
        // Predicated region
        $region49: #{tpu_custom_call.1} parent=31 // pred_check
          %p441 = pneg %p115
        $region50: #{tpu_custom_call.1} parent=31 // pred_check_branch
          %443 = sbr.rel (%p441) target = $region52
        $region51: #{tpu_custom_call.1} parent=31 // pred_region
          %s444 = smul.u32 8, %s25
          %s446 = ssub.s32 1024, 1024
          %447 = vsyncadd %s437, %s446
          %s448 = smul.addr %s24, 16
          %s449 = sadd.s32 %s444, %s448
          %s450 = smul.addr %s449, 128
          %s451 = scalar_lea.hbm %s4, %s450
          %s452 = sshll.u32 %s440, 4
          %s453 = int_to_ptr.vmem [resolvable:$true] %s452
          %458 = dma.vmem_to_hbm [thread:$0]  %s453, 1024, %s451, %s437, 128, 128, 8
        $region52: #{tpu_custom_call.1} parent=31 // pred_fallthru
          _
      $region32: #{tpu_custom_call.1} parent=5 // pred_fallthru
        _
      %p459 = scmp.le.s32.totalorder 2, %s15
      // Predicated region
      $region53: #{tpu_custom_call.1} parent=5 // pred_check
        %p460 = pneg %p459
      $region54: #{tpu_custom_call.1} parent=5 // pred_check_branch
        %462 = sbr.rel (%p460) target = $region56
      $region55: #{tpu_custom_call.1} parent=5 // pred_region
        %s463 = ssub.s32 %s15, 2
        // Predicated region
        $region57: #{tpu_custom_call.1} parent=55 // pred_check
          %p464 = pneg %p121
        $region58: #{tpu_custom_call.1} parent=55 // pred_check_branch
          %466 = sbr.rel (%p464) target = $region60
        $region59: #{tpu_custom_call.1} parent=55 // pred_region
          %s467 = sand.u32 %s106, 1
          %s468 = scalar_lea.sflag [#allocation6], %s467
          %s469 = sand.u32 %s106, 1
          %s470 = smul.addr %s469, 64
          %s471 = scalar_lea.vmem [#allocation9], %s470
          %472 = dma.done %s468, 1024
        $region60: #{tpu_custom_call.1} parent=55 // pred_fallthru
          _
      $region56: #{tpu_custom_call.1} parent=5 // pred_fallthru
        _
    $region6: #{tpu_custom_call.1} parent=1 // loop_footer
      %s19 = sadd.s32 1, %s15
    $region7: #{tpu_custom_call.1} parent=1 // loop_footer_branch
      %14 = sbr.rel target = $region3
    $region8: #{tpu_custom_call.1} parent=1 // loop_exit
      _
    %473 = vsyncpa [#allocation5], 1
    %s474 = scalar_lea.sflag [#allocation5], 1
    %475 = vsyncpa %s474, 1
    %476 = vsyncpa [#allocation8], 1
    %477 = vsyncpa [#allocation6], 1
    %s478 = scalar_lea.sflag [#allocation6], 1
    %479 = vsyncpa %s478, 1
  %480 = vsyncmov [#allocation3]
  %s481 = vpop.sfrf %480
  %p482 = scmp.eq.s32.totalorder %s481, 0
  %p483 = pneg %p482
  %485 = shalt.err (%p483)

</llo_original>
